<compile_context>
chip_gen: v5e
topology: v5e:2x2
jax: 0.10.0
libtpu: 0.0.40
codegen_flags: <defaults>
</compile_context>

<pallas_src>
import jax
import jax.numpy as jnp
from jax.experimental import pallas as pl
from jax.experimental.pallas import tpu as pltpu

_LANE = 128
_EDGES = ((0, 1), (0, 2), (1, 2))   # (endpoint_i, endpoint_j) per face edge


# ----------------------------------------------------------------------------
# Kernels
# ----------------------------------------------------------------------------
def _sq_edge_len(pts, i, j, base):
    """Squared distance between endpoints i and j. pts: (B, 18, TF); base=0 pred, 9 gt."""
    acc = None
    for c in range(3):
        d = pts[:, base + 3 * i + c, :] - pts[:, base + 3 * j + c, :]
        sq = d * d
        acc = sq if acc is None else acc + sq
    return acc  # (B, TF)


def _edge_loss_kernel(pts_ref, out_ref):
    """No-mask variant. pts_ref: (B, 18, TF). out_ref: (1, 1, 128) partial sum."""
    pts = pts_ref[...]
    acc = None
    for (i, j) in _EDGES:
        d_out = jnp.sqrt(_sq_edge_len(pts, i, j, 0))
        d_gt = jnp.sqrt(_sq_edge_len(pts, i, j, 9))
        diff = jnp.abs(d_out - d_gt)
        acc = diff if acc is None else acc + diff
    total = jnp.sum(acc)
    out_ref[...] = jnp.broadcast_to(total, out_ref.shape).astype(jnp.float32)


def _edge_loss_kernel_masked(pts_ref, valid_ref, out_ref):
    """Masked variant. valid_ref: (B, 3, TF), one plane per edge."""
    pts = pts_ref[...]
    valid = valid_ref[...]
    acc = None
    for e, (i, j) in enumerate(_EDGES):
        d_out = jnp.sqrt(_sq_edge_len(pts, i, j, 0))
        d_gt = jnp.sqrt(_sq_edge_len(pts, i, j, 9))
        diff = jnp.abs(d_out - d_gt) * valid[:, e, :]
        acc = diff if acc is None else acc + diff
    total = jnp.sum(acc)
    out_ref[...] = jnp.broadcast_to(total, out_ref.shape).astype(jnp.float32)


# ----------------------------------------------------------------------------
# Wrapper-side layout plumbing
# ----------------------------------------------------------------------------
def _round_up(x, m):
    return -(-x // m) * m


def _choose_tile(B, F, has_valid):
    """Pick face-tile size TF (multiple of 128) from a conservative VMEM budget."""
    rows = 18 + (3 if has_valid else 0)
    budget = 8 * 1024 * 1024                 # input bytes per tile set, double-buffered
    tf_cap = budget // (rows * B * 4 * 2)
    tf_cap = max(_LANE, (tf_cap // _LANE) * _LANE)
    tf_cap = min(tf_cap, 4096)
    f128 = _round_up(F, _LANE)
    if f128 <= tf_cap:
        return f128, f128                    # single tile covering padded F
    return tf_cap, _round_up(F, tf_cap)


def _build_slab(coord_out, coord_gt, face, f_pad):
    """Gather face endpoints and pack to (B, 18, f_pad): [pred ep0..2 xyz, gt ep0..2 xyz]."""
    B = coord_out.shape[0]
    F = face.shape[0]

    def planes(coord):
        g = coord[:, face, :]                  # (B, F, 3 endpoints, 3 comps)
        g = jnp.transpose(g, (0, 2, 3, 1))     # (B, 3 endpoints, 3 comps, F)
        return g.reshape(B, 9, F)

    slab = jnp.concatenate([planes(coord_out), planes(coord_gt)], axis=1)  # (B, 18, F)
    if f_pad > F:
        slab = jnp.pad(slab, ((0, 0), (0, 0), (0, f_pad - F)))
    return slab.astype(jnp.float32)


def _run_kernel(slab, valid, tf):
    B, _, f_pad = slab.shape
    num_tiles = f_pad // tf

    if valid is None:
        kernel = _edge_loss_kernel
        in_specs = [pl.BlockSpec((B, 18, tf), lambda i: (0, 0, i))]
        args = (slab,)
        in_bytes = slab.size * 4
    else:
        kernel = _edge_loss_kernel_masked
        in_specs = [
            pl.BlockSpec((B, 18, tf), lambda i: (0, 0, i)),
            pl.BlockSpec((B, 3, tf), lambda i: (0, 0, i)),
        ]
        args = (slab, valid)
        in_bytes = slab.size * 4 + valid.size * 4

    cost = pl.CostEstimate(
        flops=int(60 * B * f_pad),
        transcendentals=int(6 * B * f_pad),      # sqrt lands on the otherwise-idle EUP slot
        bytes_accessed=int(in_bytes + num_tiles * _LANE * 4),
    )

    partials = pl.pallas_call(
        kernel,
        out_shape=jax.ShapeDtypeStruct((num_tiles, 1, _LANE), jnp.float32),
        grid=(num_tiles,),
        in_specs=in_specs,
        out_specs=pl.BlockSpec((1, 1, _LANE), lambda i: (i, 0, 0)),
        compiler_params=pltpu.CompilerParams(
            dimension_semantics=("parallel",)),
        cost_estimate=cost,
    )(*args)
    return jnp.sum(partials[:, 0, 0])


@jax.jit
def _loss_nomask(coord_out, coord_gt, face):
    B = coord_out.shape[0]
    F = face.shape[0]
    tf, f_pad = _choose_tile(B, F, has_valid=False)
    slab = _build_slab(coord_out, coord_gt, face, f_pad)
    total = _run_kernel(slab, None, tf)
    return total / jnp.float32(B * 3 * F)


@jax.jit
def _loss_masked(coord_out, coord_gt, face, valid_b3f):
    B = coord_out.shape[0]
    F = face.shape[0]
    tf, f_pad = _choose_tile(B, F, has_valid=True)
    slab = _build_slab(coord_out, coord_gt, face, f_pad)
    valid = valid_b3f.astype(jnp.float32)
    if f_pad > F:
        valid = jnp.pad(valid, ((0, 0), (0, 0), (0, f_pad - F)))
    total = _run_kernel(slab, valid, tf)
    # NOTE: denominator is B*3*F regardless of the mask -- matches torch.mean
    # over the full (B, 3F, 1) tensor.
    return total / jnp.float32(B * 3 * F)


def edge_length_loss(coord_out, coord_gt, face, is_valid=None):
    """JAX/Pallas equivalent of EdgeLengthLoss.forward.

    coord_out, coord_gt: (B, V, 3) float
    face:                (F, 3)    int vertex indices
    is_valid:            None, or broadcastable to (B, 3F, 1)
    Returns a scalar float32 loss.
    """
    coord_out = jnp.asarray(coord_out, jnp.float32)
    coord_gt = jnp.asarray(coord_gt, jnp.float32)
    face = jnp.asarray(face, jnp.int32)
    if is_valid is None:
        return _loss_nomask(coord_out, coord_gt, face)
    B = coord_out.shape[0]
    F = face.shape[0]
    valid = jnp.broadcast_to(
        jnp.asarray(is_valid, jnp.float32), (B, 3 * F, 1)
    ).reshape(B, 3, F)   # edge-major planes, matching torch.cat((d1,d2,d3), dim=1)
    return _loss_masked(coord_out, coord_gt, face, valid)


# ----------------------------------------------------------------------------
# Plain-JAX reference (mirrors the PyTorch forward) + self-test
# ----------------------------------------------------------------------------
def _edge_length_loss_ref(coord_out, coord_gt, face, is_valid=None):
    f0, f1, f2 = face[:, 0], face[:, 1], face[:, 2]

    def d(c, i, j):
        return jnp.sqrt(
            jnp.sum((c[:, i, :] - c[:, j, :]) ** 2, axis=2, keepdims=True))

    d1o, d2o, d3o = d(coord_out, f0, f1), d(coord_out, f0, f2), d(coord_out, f1, f2)
    d1g, d2g, d3g = d(coord_gt, f0, f1), d(coord_gt, f0, f2), d(coord_gt, f1, f2)
    loss = jnp.concatenate(
        [jnp.abs(d1o - d1g), jnp.abs(d2o - d2g), jnp.abs(d3o - d3g)], axis=1)
    if is_valid is not None:
        loss = loss * is_valid
    return jnp.mean(loss)


if __name__ == "__main__":
    key = jax.random.PRNGKey(0)
    k1, k2, k3 = jax.random.split(key, 3)

    B, V, nF = 2, 16, 20
    coord_out = jax.random.normal(k1, (B, V, 3), jnp.float32)
    coord_gt = jax.random.normal(k2, (B, V, 3), jnp.float32)

    # Deterministic synthetic triangle faces over V vertices (module __init__
    # just stores `face`; no learned parameters).
    idx = jnp.arange(nF)
    face = jnp.stack(
        [idx % V, (idx * 3 + 1) % V, (idx * 7 + 5) % V], axis=1
    ).astype(jnp.int32)

    # --- no-mask path ---
    loss = jax.block_until_ready(edge_length_loss(coord_out, coord_gt, face))
    ref = jax.block_until_ready(
        _edge_length_loss_ref(coord_out, coord_gt, face))
    assert jnp.allclose(loss, ref, atol=1e-5, rtol=1e-5), (loss, ref)

    # --- masked path (per-sample validity, broadcast like the PyTorch module) ---
    is_valid = jax.random.bernoulli(k3, 0.7, (B, 1, 1)).astype(jnp.float32)
    loss_m = jax.block_until_ready(
        edge_length_loss(coord_out, coord_gt, face, is_valid=is_valid))
    ref_m = jax.block_until_ready(
        _edge_length_loss_ref(coord_out, coord_gt, face, is_valid=is_valid))
    assert jnp.allclose(loss_m, ref_m, atol=1e-5, rtol=1e-5), (loss_m, ref_m)

    print("KERNEL_OK")
</pallas_src>

<mosaic_0001>
module attributes {stable_mosaic.version = 11 : i64} {
  func.func @_edge_loss_kernel(%arg0: i32, %arg1: memref<2x18x128xf32, #tpu.memory_space<vmem>>, %arg2: memref<1x1x128xf32, #tpu.memory_space<vmem>>) attributes {dimension_semantics = [#tpu.dimension_semantics<parallel>], iteration_bounds = array<i64: 1>, scalar_prefetch = 0 : i64, scratch_operands = 0 : i64, tpu.core_type = #tpu.core_type<tc>, window_params = [{transform_indices = @transform_0, window_bounds = array<i64: 2, 18, 128>}, {transform_indices = @transform_1, window_bounds = array<i64: 1, 1, 128>}]} {
    %c0 = arith.constant 0 : index
    %c0_0 = arith.constant 0 : index
    %c0_1 = arith.constant 0 : index
    %0 = vector.load %arg1[%c0, %c0_0, %c0_1] : memref<2x18x128xf32, #tpu.memory_space<vmem>>, vector<2x18x128xf32>
    %1 = vector.extract_strided_slice %0 {offsets = [0, 0, 0], sizes = [2, 1, 128], strides = [1, 1, 1]} : vector<2x18x128xf32> to vector<2x1x128xf32>
    %2 = vector.shape_cast %1 : vector<2x1x128xf32> to vector<2x128xf32>
    %3 = vector.extract_strided_slice %0 {offsets = [0, 3, 0], sizes = [2, 1, 128], strides = [1, 1, 1]} : vector<2x18x128xf32> to vector<2x1x128xf32>
    %4 = vector.shape_cast %3 : vector<2x1x128xf32> to vector<2x128xf32>
    %5 = arith.subf %2, %4 : vector<2x128xf32>
    %6 = arith.mulf %5, %5 : vector<2x128xf32>
    %7 = vector.extract_strided_slice %0 {offsets = [0, 1, 0], sizes = [2, 1, 128], strides = [1, 1, 1]} : vector<2x18x128xf32> to vector<2x1x128xf32>
    %8 = vector.shape_cast %7 : vector<2x1x128xf32> to vector<2x128xf32>
    %9 = vector.extract_strided_slice %0 {offsets = [0, 4, 0], sizes = [2, 1, 128], strides = [1, 1, 1]} : vector<2x18x128xf32> to vector<2x1x128xf32>
    %10 = vector.shape_cast %9 : vector<2x1x128xf32> to vector<2x128xf32>
    %11 = arith.subf %8, %10 : vector<2x128xf32>
    %12 = arith.mulf %11, %11 : vector<2x128xf32>
    %13 = arith.addf %6, %12 : vector<2x128xf32>
    %14 = vector.extract_strided_slice %0 {offsets = [0, 2, 0], sizes = [2, 1, 128], strides = [1, 1, 1]} : vector<2x18x128xf32> to vector<2x1x128xf32>
    %15 = vector.shape_cast %14 : vector<2x1x128xf32> to vector<2x128xf32>
    %16 = vector.extract_strided_slice %0 {offsets = [0, 5, 0], sizes = [2, 1, 128], strides = [1, 1, 1]} : vector<2x18x128xf32> to vector<2x1x128xf32>
    %17 = vector.shape_cast %16 : vector<2x1x128xf32> to vector<2x128xf32>
    %18 = arith.subf %15, %17 : vector<2x128xf32>
    %19 = arith.mulf %18, %18 : vector<2x128xf32>
    %20 = arith.addf %13, %19 : vector<2x128xf32>
    %21 = math.sqrt %20 : vector<2x128xf32>
    %22 = vector.extract_strided_slice %0 {offsets = [0, 9, 0], sizes = [2, 1, 128], strides = [1, 1, 1]} : vector<2x18x128xf32> to vector<2x1x128xf32>
    %23 = vector.shape_cast %22 : vector<2x1x128xf32> to vector<2x128xf32>
    %24 = vector.extract_strided_slice %0 {offsets = [0, 12, 0], sizes = [2, 1, 128], strides = [1, 1, 1]} : vector<2x18x128xf32> to vector<2x1x128xf32>
    %25 = vector.shape_cast %24 : vector<2x1x128xf32> to vector<2x128xf32>
    %26 = arith.subf %23, %25 : vector<2x128xf32>
    %27 = arith.mulf %26, %26 : vector<2x128xf32>
    %28 = vector.extract_strided_slice %0 {offsets = [0, 10, 0], sizes = [2, 1, 128], strides = [1, 1, 1]} : vector<2x18x128xf32> to vector<2x1x128xf32>
    %29 = vector.shape_cast %28 : vector<2x1x128xf32> to vector<2x128xf32>
    %30 = vector.extract_strided_slice %0 {offsets = [0, 13, 0], sizes = [2, 1, 128], strides = [1, 1, 1]} : vector<2x18x128xf32> to vector<2x1x128xf32>
    %31 = vector.shape_cast %30 : vector<2x1x128xf32> to vector<2x128xf32>
    %32 = arith.subf %29, %31 : vector<2x128xf32>
    %33 = arith.mulf %32, %32 : vector<2x128xf32>
    %34 = arith.addf %27, %33 : vector<2x128xf32>
    %35 = vector.extract_strided_slice %0 {offsets = [0, 11, 0], sizes = [2, 1, 128], strides = [1, 1, 1]} : vector<2x18x128xf32> to vector<2x1x128xf32>
    %36 = vector.shape_cast %35 : vector<2x1x128xf32> to vector<2x128xf32>
    %37 = vector.extract_strided_slice %0 {offsets = [0, 14, 0], sizes = [2, 1, 128], strides = [1, 1, 1]} : vector<2x18x128xf32> to vector<2x1x128xf32>
    %38 = vector.shape_cast %37 : vector<2x1x128xf32> to vector<2x128xf32>
    %39 = arith.subf %36, %38 : vector<2x128xf32>
    %40 = arith.mulf %39, %39 : vector<2x128xf32>
    %41 = arith.addf %34, %40 : vector<2x128xf32>
    %42 = math.sqrt %41 : vector<2x128xf32>
    %43 = arith.subf %21, %42 : vector<2x128xf32>
    %44 = math.absf %43 : vector<2x128xf32>
    %45 = vector.extract_strided_slice %0 {offsets = [0, 0, 0], sizes = [2, 1, 128], strides = [1, 1, 1]} : vector<2x18x128xf32> to vector<2x1x128xf32>
    %46 = vector.shape_cast %45 : vector<2x1x128xf32> to vector<2x128xf32>
    %47 = vector.extract_strided_slice %0 {offsets = [0, 6, 0], sizes = [2, 1, 128], strides = [1, 1, 1]} : vector<2x18x128xf32> to vector<2x1x128xf32>
    %48 = vector.shape_cast %47 : vector<2x1x128xf32> to vector<2x128xf32>
    %49 = arith.subf %46, %48 : vector<2x128xf32>
    %50 = arith.mulf %49, %49 : vector<2x128xf32>
    %51 = vector.extract_strided_slice %0 {offsets = [0, 1, 0], sizes = [2, 1, 128], strides = [1, 1, 1]} : vector<2x18x128xf32> to vector<2x1x128xf32>
    %52 = vector.shape_cast %51 : vector<2x1x128xf32> to vector<2x128xf32>
    %53 = vector.extract_strided_slice %0 {offsets = [0, 7, 0], sizes = [2, 1, 128], strides = [1, 1, 1]} : vector<2x18x128xf32> to vector<2x1x128xf32>
    %54 = vector.shape_cast %53 : vector<2x1x128xf32> to vector<2x128xf32>
    %55 = arith.subf %52, %54 : vector<2x128xf32>
    %56 = arith.mulf %55, %55 : vector<2x128xf32>
    %57 = arith.addf %50, %56 : vector<2x128xf32>
    %58 = vector.extract_strided_slice %0 {offsets = [0, 2, 0], sizes = [2, 1, 128], strides = [1, 1, 1]} : vector<2x18x128xf32> to vector<2x1x128xf32>
    %59 = vector.shape_cast %58 : vector<2x1x128xf32> to vector<2x128xf32>
    %60 = vector.extract_strided_slice %0 {offsets = [0, 8, 0], sizes = [2, 1, 128], strides = [1, 1, 1]} : vector<2x18x128xf32> to vector<2x1x128xf32>
    %61 = vector.shape_cast %60 : vector<2x1x128xf32> to vector<2x128xf32>
    %62 = arith.subf %59, %61 : vector<2x128xf32>
    %63 = arith.mulf %62, %62 : vector<2x128xf32>
    %64 = arith.addf %57, %63 : vector<2x128xf32>
    %65 = math.sqrt %64 : vector<2x128xf32>
    %66 = vector.extract_strided_slice %0 {offsets = [0, 9, 0], sizes = [2, 1, 128], strides = [1, 1, 1]} : vector<2x18x128xf32> to vector<2x1x128xf32>
    %67 = vector.shape_cast %66 : vector<2x1x128xf32> to vector<2x128xf32>
    %68 = vector.extract_strided_slice %0 {offsets = [0, 15, 0], sizes = [2, 1, 128], strides = [1, 1, 1]} : vector<2x18x128xf32> to vector<2x1x128xf32>
    %69 = vector.shape_cast %68 : vector<2x1x128xf32> to vector<2x128xf32>
    %70 = arith.subf %67, %69 : vector<2x128xf32>
    %71 = arith.mulf %70, %70 : vector<2x128xf32>
    %72 = vector.extract_strided_slice %0 {offsets = [0, 10, 0], sizes = [2, 1, 128], strides = [1, 1, 1]} : vector<2x18x128xf32> to vector<2x1x128xf32>
    %73 = vector.shape_cast %72 : vector<2x1x128xf32> to vector<2x128xf32>
    %74 = vector.extract_strided_slice %0 {offsets = [0, 16, 0], sizes = [2, 1, 128], strides = [1, 1, 1]} : vector<2x18x128xf32> to vector<2x1x128xf32>
    %75 = vector.shape_cast %74 : vector<2x1x128xf32> to vector<2x128xf32>
    %76 = arith.subf %73, %75 : vector<2x128xf32>
    %77 = arith.mulf %76, %76 : vector<2x128xf32>
    %78 = arith.addf %71, %77 : vector<2x128xf32>
    %79 = vector.extract_strided_slice %0 {offsets = [0, 11, 0], sizes = [2, 1, 128], strides = [1, 1, 1]} : vector<2x18x128xf32> to vector<2x1x128xf32>
    %80 = vector.shape_cast %79 : vector<2x1x128xf32> to vector<2x128xf32>
    %81 = vector.extract_strided_slice %0 {offsets = [0, 17, 0], sizes = [2, 1, 128], strides = [1, 1, 1]} : vector<2x18x128xf32> to vector<2x1x128xf32>
    %82 = vector.shape_cast %81 : vector<2x1x128xf32> to vector<2x128xf32>
    %83 = arith.subf %80, %82 : vector<2x128xf32>
    %84 = arith.mulf %83, %83 : vector<2x128xf32>
    %85 = arith.addf %78, %84 : vector<2x128xf32>
    %86 = math.sqrt %85 : vector<2x128xf32>
    %87 = arith.subf %65, %86 : vector<2x128xf32>
    %88 = math.absf %87 : vector<2x128xf32>
    %89 = arith.addf %44, %88 : vector<2x128xf32>
    %90 = vector.extract_strided_slice %0 {offsets = [0, 3, 0], sizes = [2, 1, 128], strides = [1, 1, 1]} : vector<2x18x128xf32> to vector<2x1x128xf32>
    %91 = vector.shape_cast %90 : vector<2x1x128xf32> to vector<2x128xf32>
    %92 = vector.extract_strided_slice %0 {offsets = [0, 6, 0], sizes = [2, 1, 128], strides = [1, 1, 1]} : vector<2x18x128xf32> to vector<2x1x128xf32>
    %93 = vector.shape_cast %92 : vector<2x1x128xf32> to vector<2x128xf32>
    %94 = arith.subf %91, %93 : vector<2x128xf32>
    %95 = arith.mulf %94, %94 : vector<2x128xf32>
    %96 = vector.extract_strided_slice %0 {offsets = [0, 4, 0], sizes = [2, 1, 128], strides = [1, 1, 1]} : vector<2x18x128xf32> to vector<2x1x128xf32>
    %97 = vector.shape_cast %96 : vector<2x1x128xf32> to vector<2x128xf32>
    %98 = vector.extract_strided_slice %0 {offsets = [0, 7, 0], sizes = [2, 1, 128], strides = [1, 1, 1]} : vector<2x18x128xf32> to vector<2x1x128xf32>
    %99 = vector.shape_cast %98 : vector<2x1x128xf32> to vector<2x128xf32>
    %100 = arith.subf %97, %99 : vector<2x128xf32>
    %101 = arith.mulf %100, %100 : vector<2x128xf32>
    %102 = arith.addf %95, %101 : vector<2x128xf32>
    %103 = vector.extract_strided_slice %0 {offsets = [0, 5, 0], sizes = [2, 1, 128], strides = [1, 1, 1]} : vector<2x18x128xf32> to vector<2x1x128xf32>
    %104 = vector.shape_cast %103 : vector<2x1x128xf32> to vector<2x128xf32>
    %105 = vector.extract_strided_slice %0 {offsets = [0, 8, 0], sizes = [2, 1, 128], strides = [1, 1, 1]} : vector<2x18x128xf32> to vector<2x1x128xf32>
    %106 = vector.shape_cast %105 : vector<2x1x128xf32> to vector<2x128xf32>
    %107 = arith.subf %104, %106 : vector<2x128xf32>
    %108 = arith.mulf %107, %107 : vector<2x128xf32>
    %109 = arith.addf %102, %108 : vector<2x128xf32>
    %110 = math.sqrt %109 : vector<2x128xf32>
    %111 = vector.extract_strided_slice %0 {offsets = [0, 12, 0], sizes = [2, 1, 128], strides = [1, 1, 1]} : vector<2x18x128xf32> to vector<2x1x128xf32>
    %112 = vector.shape_cast %111 : vector<2x1x128xf32> to vector<2x128xf32>
    %113 = vector.extract_strided_slice %0 {offsets = [0, 15, 0], sizes = [2, 1, 128], strides = [1, 1, 1]} : vector<2x18x128xf32> to vector<2x1x128xf32>
    %114 = vector.shape_cast %113 : vector<2x1x128xf32> to vector<2x128xf32>
    %115 = arith.subf %112, %114 : vector<2x128xf32>
    %116 = arith.mulf %115, %115 : vector<2x128xf32>
    %117 = vector.extract_strided_slice %0 {offsets = [0, 13, 0], sizes = [2, 1, 128], strides = [1, 1, 1]} : vector<2x18x128xf32> to vector<2x1x128xf32>
    %118 = vector.shape_cast %117 : vector<2x1x128xf32> to vector<2x128xf32>
    %119 = vector.extract_strided_slice %0 {offsets = [0, 16, 0], sizes = [2, 1, 128], strides = [1, 1, 1]} : vector<2x18x128xf32> to vector<2x1x128xf32>
    %120 = vector.shape_cast %119 : vector<2x1x128xf32> to vector<2x128xf32>
    %121 = arith.subf %118, %120 : vector<2x128xf32>
    %122 = arith.mulf %121, %121 : vector<2x128xf32>
    %123 = arith.addf %116, %122 : vector<2x128xf32>
    %124 = vector.extract_strided_slice %0 {offsets = [0, 14, 0], sizes = [2, 1, 128], strides = [1, 1, 1]} : vector<2x18x128xf32> to vector<2x1x128xf32>
    %125 = vector.shape_cast %124 : vector<2x1x128xf32> to vector<2x128xf32>
    %126 = vector.extract_strided_slice %0 {offsets = [0, 17, 0], sizes = [2, 1, 128], strides = [1, 1, 1]} : vector<2x18x128xf32> to vector<2x1x128xf32>
    %127 = vector.shape_cast %126 : vector<2x1x128xf32> to vector<2x128xf32>
    %128 = arith.subf %125, %127 : vector<2x128xf32>
    %129 = arith.mulf %128, %128 : vector<2x128xf32>
    %130 = arith.addf %123, %129 : vector<2x128xf32>
    %131 = math.sqrt %130 : vector<2x128xf32>
    %132 = arith.subf %110, %131 : vector<2x128xf32>
    %133 = math.absf %132 : vector<2x128xf32>
    %134 = arith.addf %89, %133 : vector<2x128xf32>
    %135 = vector.shape_cast %134 : vector<2x128xf32> to vector<1x2x128xf32>
    %cst = arith.constant dense<0.000000e+00> : vector<1xf32>
    %136 = vector.multi_reduction <add>, %135, %cst [1, 2] : vector<1x2x128xf32> to vector<1xf32>
    %137 = vector.shape_cast %136 : vector<1xf32> to vector<1x1x1xf32>
    %138 = vector.extract %137[0, 0, 0] : f32 from vector<1x1x1xf32>
    %139 = vector.broadcast %138 : f32 to vector<1x1x128xf32>
    %c0_2 = arith.constant 0 : index
    %c0_3 = arith.constant 0 : index
    %c0_4 = arith.constant 0 : index
    %140 = vector.load %arg2[%c0_2, %c0_3, %c0_4] : memref<1x1x128xf32, #tpu.memory_space<vmem>>, vector<1x1x128xf32>
    tpu.vector_store %arg2[%c0_2, %c0_3, %c0_4], %139 {strides = array<i32>} : memref<1x1x128xf32, #tpu.memory_space<vmem>>, vector<1x1x128xf32>,
    return
  }
  func.func @transform_0(%arg0: i32) -> (i32, i32, i32) {
    %c0_i32 = arith.constant 0 : i32
    %c0_i32_0 = arith.constant 0 : i32
    %c0_i32_1 = arith.constant 0 : i32
    return %c0_i32, %c0_i32_0, %arg0 : i32, i32, i32
  }
  func.func @transform_1(%arg0: i32) -> (i32, i32, i32) {
    %c0_i32 = arith.constant 0 : i32
    %c0_i32_0 = arith.constant 0 : i32
    %c0_i32_1 = arith.constant 0 : i32
    return %arg0, %c0_i32, %c0_i32_0 : i32, i32, i32
  }
}

</mosaic_0001>

<llo_original>
// kernel: _loss_nomask.1
$region0: #{_loss_nomask.1}
  #allocation0 [shape = 'u32[]', space=smem, size = 0x4, offset = 0x4, fixed_abs, tag = 'smem constant byte address 0x4 - core index']
  #allocation1 [shape = 'u32[72,128]{1,0:T(1,128)}', space=vmem, size = 0x9000, scoped, tag = 'internal scratch']
  %s0 = inlined_call_operand.vmem [shape: f32[2,18,128], index: 0, kind: input, shape index: {}]
  %s1 = inlined_call_operand.vmem [shape: f32[1,1,128], index: 1, kind: output, shape index: {}]
  %s2 = sld [smem:[#allocation0]]
  $region14: #{_loss_nomask.1} parent=0
    _
  %s4 = ssub.s32 1, %s2
  %s5 = scalar_select 0, %s4, %s2
  // Predicated region
  $region2: #{_loss_nomask.1} parent=0 // pred_check
    _
  $region3: #{_loss_nomask.1} parent=0 // pred_check_branch
    %7 = sbr.rel (0) target = $region5
  $region4: #{_loss_nomask.1} parent=0 // pred_region
    _
  $region5: #{_loss_nomask.1} parent=0 // pred_fallthru
    _
  %v8 = vld [vmem:[%s0] sm:$0xff]
  %v9 = vld [vmem:[%s0 + $0x8] sm:$0xff]
  %v10 = vld [vmem:[%s0 + $0x10] sm:$0x3]
  %v11 = vld [vmem:[%s0 + $0x18] sm:$0xff]
  %v12 = vld [vmem:[%s0 + $0x20] sm:$0xff]
  %v13 = vld [vmem:[%s0 + $0x28] sm:$0x3]
  %v16 = vrot.slane %v8, 3
  %v17 = vrot.slane %v11, 3
  %v20 = vsub.f32 %v8, %v16
  %v21 = vsub.f32 %v11, %v17
  %v22 = vmul.f32 %v20, %v20
  %v23 = vmul.f32 %v21, %v21
  %v26 = vrot.slane %v22, 1
  %v27 = vrot.slane %v23, 1
  %v30 = vadd.f32 %v22, %v26
  %v31 = vadd.f32 %v23, %v27
  %v32 = vrot.slane %v22, 2
  %v33 = vrot.slane %v23, 2
  %v36 = vadd.f32 %v30, %v32
  %v37 = vadd.f32 %v31, %v33
  %v38 = vrsqrt.pop %v36
  %v39 = vmul.f32 %v38, %v36
  %v40 = vmul.f32 %v39, %v38
  %v41 = vmul.f32 0.5, %v40
  %v42 = vsub.f32 1.5, %v41
  %v43 = vmul.f32 %v38, %v42
  %v44 = vmul.f32 %v36, %v43
  %vm45 = vcmp.eq.f32.partialorder %v36, inf
  %v46 = vsel %vm45, %v36, %v44
  %vm47 = vcmp.eq.f32.partialorder %v36, 0.0
  %v48 = vand.u32 %v36, 2147483648
  %v49 = vsel %vm47, %v48, %v46
  %v50 = vrsqrt.pop %v37
  %v51 = vmul.f32 %v50, %v37
  %v52 = vmul.f32 %v51, %v50
  %v53 = vmul.f32 0.5, %v52
  %v54 = vsub.f32 1.5, %v53
  %v55 = vmul.f32 %v50, %v54
  %v56 = vmul.f32 %v37, %v55
  %vm57 = vcmp.eq.f32.partialorder %v37, inf
  %v58 = vsel %vm57, %v37, %v56
  %vm59 = vcmp.eq.f32.partialorder %v37, 0.0
  %v60 = vand.u32 %v37, 2147483648
  %v61 = vsel %vm59, %v60, %v58
  %v64 = vrot.slane %v9, 3
  %v65 = vrot.slane %v12, 3
  %v68 = vsub.f32 %v9, %v64
  %v69 = vsub.f32 %v12, %v65
  %v70 = vmul.f32 %v68, %v68
  %v71 = vmul.f32 %v69, %v69
  %v74 = vrot.slane %v70, 1
  %v75 = vrot.slane %v71, 1
  %v78 = vadd.f32 %v70, %v74
  %v79 = vadd.f32 %v71, %v75
  %v80 = vrot.slane %v70, 2
  %v81 = vrot.slane %v71, 2
  %v84 = vadd.f32 %v78, %v80
  %v85 = vadd.f32 %v79, %v81
  %v86 = vrsqrt.pop %v84
  %v87 = vmul.f32 %v86, %v84
  %v88 = vmul.f32 %v87, %v86
  %v89 = vmul.f32 0.5, %v88
  %v90 = vsub.f32 1.5, %v89
  %v91 = vmul.f32 %v86, %v90
  %v92 = vmul.f32 %v84, %v91
  %vm93 = vcmp.eq.f32.partialorder %v84, inf
  %v94 = vsel %vm93, %v84, %v92
  %vm95 = vcmp.eq.f32.partialorder %v84, 0.0
  %v96 = vand.u32 %v84, 2147483648
  %v97 = vsel %vm95, %v96, %v94
  %v98 = vrsqrt.pop %v85
  %v99 = vmul.f32 %v98, %v85
  %v100 = vmul.f32 %v99, %v98
  %v101 = vmul.f32 0.5, %v100
  %v102 = vsub.f32 1.5, %v101
  %v103 = vmul.f32 %v98, %v102
  %v104 = vmul.f32 %v85, %v103
  %vm105 = vcmp.eq.f32.partialorder %v85, inf
  %v106 = vsel %vm105, %v85, %v104
  %vm107 = vcmp.eq.f32.partialorder %v85, 0.0
  %v108 = vand.u32 %v85, 2147483648
  %v109 = vsel %vm107, %v108, %v106
  %v112 = vrot.slane %v97, 1
  %v113 = vrot.slane %v109, 1
  %v116 = vsub.f32 %v49, %v112
  %v117 = vsub.f32 %v61, %v113
  %v118 = vand.u32 2147483647, %v116
  %v119 = vand.u32 2147483647, %v117
  %v120 = vrot.slane %v8, 6
  %v121 = vrot.slane %v11, 6
  %v124 = vsub.f32 %v8, %v120
  %v125 = vsub.f32 %v11, %v121
  %v126 = vmul.f32 %v124, %v124
  %v127 = vmul.f32 %v125, %v125
  %v130 = vrot.slane %v126, 1
  %v131 = vrot.slane %v127, 1
  %v134 = vadd.f32 %v126, %v130
  %v135 = vadd.f32 %v127, %v131
  %v136 = vrot.slane %v9, 6
  %v137 = vrot.slane %v12, 6
  %v140 = vsub.f32 %v8, %v136
  %v141 = vsub.f32 %v11, %v137
  %v142 = vmul.f32 %v140, %v140
  %v143 = vmul.f32 %v141, %v141
  %v146 = vrot.slane %v142, 2
  %v147 = vrot.slane %v143, 2
  %v150 = vadd.f32 %v134, %v146
  %v151 = vadd.f32 %v135, %v147
  %v152 = vrsqrt.pop %v150
  %v153 = vmul.f32 %v152, %v150
  %v154 = vmul.f32 %v153, %v152
  %v155 = vmul.f32 0.5, %v154
  %v156 = vsub.f32 1.5, %v155
  %v157 = vmul.f32 %v152, %v156
  %v158 = vmul.f32 %v150, %v157
  %vm159 = vcmp.eq.f32.partialorder %v150, inf
  %v160 = vsel %vm159, %v150, %v158
  %vm161 = vcmp.eq.f32.partialorder %v150, 0.0
  %v162 = vand.u32 %v150, 2147483648
  %v163 = vsel %vm161, %v162, %v160
  %v164 = vrsqrt.pop %v151
  %v165 = vmul.f32 %v164, %v151
  %v166 = vmul.f32 %v165, %v164
  %v167 = vmul.f32 0.5, %v166
  %v168 = vsub.f32 1.5, %v167
  %v169 = vmul.f32 %v164, %v168
  %v170 = vmul.f32 %v151, %v169
  %vm171 = vcmp.eq.f32.partialorder %v151, inf
  %v172 = vsel %vm171, %v151, %v170
  %vm173 = vcmp.eq.f32.partialorder %v151, 0.0
  %v174 = vand.u32 %v151, 2147483648
  %v175 = vsel %vm173, %v174, %v172
  %v176 = vsub.f32 %v9, %v136
  %v177 = vsub.f32 %v12, %v137
  %v178 = vmul.f32 %v176, %v176
  %v179 = vmul.f32 %v177, %v177
  %v182 = vrot.slane %v10, 6
  %v183 = vrot.slane %v13, 6
  %v186 = vsub.f32 %v9, %v182
  %v187 = vsub.f32 %v12, %v183
  %v188 = vmul.f32 %v186, %v186
  %v189 = vmul.f32 %v187, %v187
  %v192 = vrot.slane %v188, 1
  %v193 = vrot.slane %v189, 1
  %v196 = vadd.f32 %v178, %v192
  %v197 = vadd.f32 %v179, %v193
  %v198 = vrot.slane %v188, 2
  %v199 = vrot.slane %v189, 2
  %v202 = vadd.f32 %v196, %v198
  %v203 = vadd.f32 %v197, %v199
  %v204 = vrsqrt.pop %v202
  %v205 = vmul.f32 %v204, %v202
  %v206 = vmul.f32 %v205, %v204
  %v207 = vmul.f32 0.5, %v206
  %v208 = vsub.f32 1.5, %v207
  %v209 = vmul.f32 %v204, %v208
  %v210 = vmul.f32 %v202, %v209
  %vm211 = vcmp.eq.f32.partialorder %v202, inf
  %v212 = vsel %vm211, %v202, %v210
  %vm213 = vcmp.eq.f32.partialorder %v202, 0.0
  %v214 = vand.u32 %v202, 2147483648
  %v215 = vsel %vm213, %v214, %v212
  %v216 = vrsqrt.pop %v203
  %v217 = vmul.f32 %v216, %v203
  %v218 = vmul.f32 %v217, %v216
  %v219 = vmul.f32 0.5, %v218
  %v220 = vsub.f32 1.5, %v219
  %v221 = vmul.f32 %v216, %v220
  %v222 = vmul.f32 %v203, %v221
  %vm223 = vcmp.eq.f32.partialorder %v203, inf
  %v224 = vsel %vm223, %v203, %v222
  %vm225 = vcmp.eq.f32.partialorder %v203, 0.0
  %v226 = vand.u32 %v203, 2147483648
  %v227 = vsel %vm225, %v226, %v224
  %v230 = vrot.slane %v215, 1
  %v231 = vrot.slane %v227, 1
  %v234 = vsub.f32 %v163, %v230
  %v235 = vsub.f32 %v175, %v231
  %v236 = vand.u32 2147483647, %v234
  %v237 = vand.u32 2147483647, %v235
  %v238 = vadd.f32 %v118, %v236
  %v239 = vadd.f32 %v119, %v237
  %v240 = vsub.f32 %v8, %v64
  %v241 = vsub.f32 %v11, %v65
  %v242 = vmul.f32 %v240, %v240
  %v243 = vmul.f32 %v241, %v241
  %v246 = vrot.slane %v242, 2
  %v247 = vrot.slane %v243, 2
  %v250 = vadd.f32 %v30, %v246
  %v251 = vadd.f32 %v31, %v247
  %v252 = vrsqrt.pop %v250
  %v253 = vmul.f32 %v252, %v250
  %v254 = vmul.f32 %v253, %v252
  %v255 = vmul.f32 0.5, %v254
  %v256 = vsub.f32 1.5, %v255
  %v257 = vmul.f32 %v252, %v256
  %v258 = vmul.f32 %v250, %v257
  %vm259 = vcmp.eq.f32.partialorder %v250, inf
  %v260 = vsel %vm259, %v250, %v258
  %vm261 = vcmp.eq.f32.partialorder %v250, 0.0
  %v262 = vand.u32 %v250, 2147483648
  %v263 = vsel %vm261, %v262, %v260
  %v264 = vrsqrt.pop %v251
  %v265 = vmul.f32 %v264, %v251
  %v266 = vmul.f32 %v265, %v264
  %v267 = vmul.f32 0.5, %v266
  %v268 = vsub.f32 1.5, %v267
  %v269 = vmul.f32 %v264, %v268
  %v270 = vmul.f32 %v251, %v269
  %vm271 = vcmp.eq.f32.partialorder %v251, inf
  %v272 = vsel %vm271, %v251, %v270
  %vm273 = vcmp.eq.f32.partialorder %v251, 0.0
  %v274 = vand.u32 %v251, 2147483648
  %v275 = vsel %vm273, %v274, %v272
  %v276 = vrot.slane %v10, 3
  %v277 = vrot.slane %v13, 3
  %v280 = vsub.f32 %v9, %v276
  %v281 = vsub.f32 %v12, %v277
  %v282 = vmul.f32 %v280, %v280
  %v283 = vmul.f32 %v281, %v281
  %v286 = vrot.slane %v282, 1
  %v287 = vrot.slane %v283, 1
  %v290 = vadd.f32 %v70, %v286
  %v291 = vadd.f32 %v71, %v287
  %v292 = vrot.slane %v282, 2
  %v293 = vrot.slane %v283, 2
  %v296 = vadd.f32 %v290, %v292
  %v297 = vadd.f32 %v291, %v293
  %v298 = vrsqrt.pop %v296
  %v299 = vmul.f32 %v298, %v296
  %v300 = vmul.f32 %v299, %v298
  %v301 = vmul.f32 0.5, %v300
  %v302 = vsub.f32 1.5, %v301
  %v303 = vmul.f32 %v298, %v302
  %v304 = vmul.f32 %v296, %v303
  %vm305 = vcmp.eq.f32.partialorder %v296, inf
  %v306 = vsel %vm305, %v296, %v304
  %vm307 = vcmp.eq.f32.partialorder %v296, 0.0
  %v308 = vand.u32 %v296, 2147483648
  %v309 = vsel %vm307, %v308, %v306
  %v310 = vrsqrt.pop %v297
  %v311 = vmul.f32 %v310, %v297
  %v312 = vmul.f32 %v311, %v310
  %v313 = vmul.f32 0.5, %v312
  %v314 = vsub.f32 1.5, %v313
  %v315 = vmul.f32 %v310, %v314
  %v316 = vmul.f32 %v297, %v315
  %vm317 = vcmp.eq.f32.partialorder %v297, inf
  %v318 = vsel %vm317, %v297, %v316
  %vm319 = vcmp.eq.f32.partialorder %v297, 0.0
  %v320 = vand.u32 %v297, 2147483648
  %v321 = vsel %vm319, %v320, %v318
  %v324 = vrot.slane %v309, 1
  %v325 = vrot.slane %v321, 1
  %v328 = vsub.f32 %v263, %v324
  %v329 = vsub.f32 %v275, %v325
  %v330 = vand.u32 2147483647, %v328
  %v331 = vand.u32 2147483647, %v329
  %v334 = vrot.slane %v330, 3
  %v335 = vrot.slane %v331, 3
  %v338 = vadd.f32 %v238, %v334
  %v339 = vadd.f32 %v239, %v335
  %v342 = vrot.slane %v339, 7
  %vm343 = vcmask 1041409
  %v344 = vsel %vm343, %v342, %v338
  %vm346 = vcmask 1041408
  %v347 = vsel %vm346, %v344, 0.0
  %348 = vadd.xlane.f32.xlu0 %v347
  %v349 = vpop.xlane.xlu0 %348
  %v350 = vrot.slane %v349, 4
  %v351 = vadd.f32 %v349, %v350
  %v352 = vrot.slane %v351, 2
  %v353 = vadd.f32 %v351, %v352
  %v354 = vrot.slane %v353, 1
  %v355 = vadd.f32 %v353, %v354
  %s356 = vtos %v355
  %v357 = vstv %s356
  %358 = vst [vmem:[%s1] sm:$0x1] %v357
  // Predicated region
  $region6: #{_loss_nomask.1} parent=0 // pred_check
    _
  $region7: #{_loss_nomask.1} parent=0 // pred_check_branch
    %360 = sbr.rel (0) target = $region9
  $region8: #{_loss_nomask.1} parent=0 // pred_region
    _
  $region9: #{_loss_nomask.1} parent=0 // pred_fallthru
    _
  // Predicated region
  $region10: #{_loss_nomask.1} parent=0 // pred_check
    _
  $region11: #{_loss_nomask.1} parent=0 // pred_check_branch
    %362 = sbr.rel (0) target = $region13
  $region12: #{_loss_nomask.1} parent=0 // pred_region
    _
  $region13: #{_loss_nomask.1} parent=0 // pred_fallthru
    _

</llo_original>
